<compile_context>
chip_gen: v7x
topology: tpu7x:2x2x1
jax: 0.10.0
libtpu: 0.0.40
codegen_flags: <defaults>
</compile_context>

<pallas_src>
from functools import partial

import jax
import jax.numpy as jnp
from jax.experimental import pallas as pl
from jax.experimental.pallas import tpu as pltpu


def _round_up(x, m):
    return ((x + m - 1) // m) * m


# ----------------------------- Pallas kernel ------------------------------ #
def _linear_kernel(x_ref, w_ref, b_ref, o_ref):
    # x_ref: (tm, K)  w_ref: (K, N_pad)  b_ref: (1, N_pad)  o_ref: (tm, N_pad)
    acc = jnp.dot(x_ref[...], w_ref[...], preferred_element_type=jnp.float32)
    o_ref[...] = (acc + b_ref[...]).astype(o_ref.dtype)


_TM_MAX = 1024  # tile of the flattened token dim; ~0.6 MiB double-buffered


def pallas_linear_padded(x2d, w_pad, b_pad):
    """y = x2d @ w_pad + b_pad with a lane-dense (N_pad % 128 == 0) output.

    x2d: (M, K), w_pad: (K, N_pad), b_pad: (1, N_pad).  Returns (M, N_pad);
    the caller slices off the padded columns.
    """
    M, K = x2d.shape
    Kw, N_pad = w_pad.shape
    assert K == Kw and N_pad % 128 == 0

    # Tile M: multiples of 8 (sublane), capped at _TM_MAX; pad rows with zeros.
    tm = _TM_MAX if M >= _TM_MAX else _round_up(M, 8)
    M_pad = _round_up(M, tm)
    if M_pad != M:
        x2d = jnp.pad(x2d, ((0, M_pad - M), (0, 0)))
    grid_m = M_pad // tm

    cost = pl.CostEstimate(
        flops=2 * M_pad * K * N_pad,
        transcendentals=0,
        bytes_accessed=4 * (M_pad * K + K * N_pad + M_pad * N_pad + N_pad),
    )

    out = pl.pallas_call(
        _linear_kernel,
        out_shape=jax.ShapeDtypeStruct((M_pad, N_pad), x2d.dtype),
        grid=(grid_m,),
        in_specs=[
            pl.BlockSpec((tm, K), lambda i: (i, 0)),       # streamed over M
            pl.BlockSpec((K, N_pad), lambda i: (0, 0)),    # weight resident
            pl.BlockSpec((1, N_pad), lambda i: (0, 0)),    # bias resident
        ],
        out_specs=pl.BlockSpec((tm, N_pad), lambda i: (i, 0)),
        compiler_params=pltpu.CompilerParams(
            # M tiles are independent -> shard across TCs on v7x; no-op on v5e/v6e.
            dimension_semantics=("parallel",),
            # Sized against v7x (64 MiB physical / 32 MiB default scoped);
            # double-buffered footprint here is well under 1 MiB.
            vmem_limit_bytes=32 * 1024 * 1024,
        ),
        cost_estimate=cost,
    )(x2d, w_pad, b_pad)
    return out[:M]


# Single jitted forward: reshape -> kernel -> slice -> reshape in one dispatch.
@partial(jax.jit, static_argnames=("n_out",))
def _linear_forward(x, w_pad, b_pad, n_out):
    orig_shape = x.shape
    x2d = x.reshape(-1, orig_shape[-1])
    y2d = pallas_linear_padded(x2d, w_pad, b_pad)
    y2d = y2d[:, :n_out]
    return y2d.reshape(*orig_shape[:-1], n_out)


# --------------------------- Wrapped "module" ----------------------------- #
class PallasLinear:
    """Deterministically initialized Linear module backed by the Pallas kernel."""

    def __init__(self, in_features, out_features, key):
        kw, kb = jax.random.split(key)
        # torch.nn.Linear-style uniform(-1/sqrt(fan_in), 1/sqrt(fan_in)) init
        bound = 1.0 / (in_features ** 0.5)
        self.in_features = in_features
        self.out_features = out_features
        self.weight = jax.random.uniform(
            kw, (in_features, out_features), jnp.float32, -bound, bound
        )
        self.bias = jax.random.uniform(
            kb, (out_features,), jnp.float32, -bound, bound
        )
        # Pad the output dim to a multiple of 128 ONCE so the kernel's stores
        # are lane-dense; keep the bias pre-shaped as (1, N_pad) (no per-call
        # reshape in the hot path).
        n_pad = _round_up(out_features, 128)
        self.n_pad = n_pad
        self.weight_padded = jnp.pad(
            self.weight, ((0, 0), (0, n_pad - out_features))
        )
        self.bias_padded = jnp.pad(
            self.bias, (0, n_pad - out_features)
        ).reshape(1, n_pad)
        # TODO(synk): once real model shapes are used (hidden >= 256), cast
        # x / W to bfloat16 at the call boundary (keep f32 accumulation) for
        # full MXU throughput on v6e/v7x.

    def __call__(self, x):
        # x: (batch, seq, hidden) or (batch, hidden)
        return _linear_forward(
            x, self.weight_padded, self.bias_padded, self.out_features
        )


# ------------------------------ DummyScope -------------------------------- #
class DummyScope:
    """Used for keeping scope the same between pretrain and interactive training.

    Faithful port of the PyTorch DummyScope: recursively nests the wrapped
    module under the attribute names in scope_list; forward delegates down
    the chain to the innermost module.  (Pure delegation; no compute.)
    """

    def __init__(self, module, scope_list):
        assert isinstance(scope_list, list) and len(scope_list) > 0
        self.scope_list = scope_list
        if len(scope_list) > 1:
            setattr(self, scope_list[0], DummyScope(module, scope_list[1:]))
        elif len(scope_list) == 1:
            setattr(self, scope_list[0], module)

    def __call__(self, *input, **kwargs):
        return getattr(self, self.scope_list[0])(*input, **kwargs)


# --------------------------------- main ----------------------------------- #
if __name__ == "__main__":
    key = jax.random.PRNGKey(0)
    k_x, k_mod = jax.random.split(key)

    batch, seq, hidden = 2, 8, 32
    x = jax.random.normal(k_x, (batch, seq, hidden), jnp.float32)

    inner = PallasLinear(hidden, hidden, k_mod)
    scoped = DummyScope(inner, ["base_model", "module", "linear"])

    # DummyScope forward == wrapped module forward
    y = scoped(x)
    y = jax.block_until_ready(y)

    # sanity: delegation is exact (same object, same result)
    y_ref = jax.block_until_ready(inner(x))
    assert y.shape == (batch, seq, hidden)
    assert bool(jnp.allclose(y, y_ref))
    # reference check of the Pallas matmul against plain jnp
    y_jnp = x.reshape(-1, hidden) @ inner.weight + inner.bias
    assert bool(jnp.allclose(y.reshape(-1, hidden), y_jnp, atol=1e-5, rtol=1e-5))

    print("KERNEL_OK")
</pallas_src>

<mosaic_0001>
module attributes {stable_mosaic.version = 11 : i64} {
  func.func @_linear_kernel(%arg0: i32, %arg1: memref<16x32xf32, #tpu.memory_space<vmem>>, %arg2: memref<32x128xf32, #tpu.memory_space<vmem>>, %arg3: memref<1x128xf32, #tpu.memory_space<vmem>>, %arg4: memref<16x128xf32, #tpu.memory_space<vmem>>) attributes {dimension_semantics = [#tpu.dimension_semantics<parallel>], iteration_bounds = array<i64: 1>, scalar_prefetch = 0 : i64, scratch_operands = 0 : i64, tpu.core_type = #tpu.core_type<tc>, window_params = [{transform_indices = @transform_0, window_bounds = array<i64: 16, 32>}, {pipeline_mode = #tpu.pipeline_mode<synchronous>, transform_indices = @transform_1, window_bounds = array<i64: 32, 128>}, {pipeline_mode = #tpu.pipeline_mode<synchronous>, transform_indices = @transform_2, window_bounds = array<i64: 1, 128>}, {transform_indices = @transform_3, window_bounds = array<i64: 16, 128>}]} {
    %c0 = arith.constant 0 : index
    %c0_0 = arith.constant 0 : index
    %0 = vector.load %arg1[%c0, %c0_0] : memref<16x32xf32, #tpu.memory_space<vmem>>, vector<16x32xf32>
    %c0_1 = arith.constant 0 : index
    %c0_2 = arith.constant 0 : index
    %1 = vector.load %arg2[%c0_1, %c0_2] : memref<32x128xf32, #tpu.memory_space<vmem>>, vector<32x128xf32>
    %cst = arith.constant dense<0.000000e+00> : vector<16x128xf32>
    %2 = tpu.matmul %0, %1, %cst {dimension_numbers = #tpu.dot_dimension_numbers<[1], [0], [0], [1], [0, 0, 1, 1], [], []>} : vector<16x32xf32>, vector<32x128xf32>, vector<16x128xf32> -> vector<16x128xf32>
    %c0_3 = arith.constant 0 : index
    %c0_4 = arith.constant 0 : index
    %3 = vector.load %arg3[%c0_3, %c0_4] : memref<1x128xf32, #tpu.memory_space<vmem>>, vector<1x128xf32>
    %4 = vector.broadcast %3 : vector<1x128xf32> to vector<16x128xf32>
    %5 = arith.addf %2, %4 : vector<16x128xf32>
    %c0_5 = arith.constant 0 : index
    %c0_6 = arith.constant 0 : index
    %6 = vector.load %arg4[%c0_5, %c0_6] : memref<16x128xf32, #tpu.memory_space<vmem>>, vector<16x128xf32>
    tpu.vector_store %arg4[%c0_5, %c0_6], %5 {strides = array<i32>} : memref<16x128xf32, #tpu.memory_space<vmem>>, vector<16x128xf32>,
    return
  }
  func.func @transform_0(%arg0: i32) -> (i32, i32) {
    %c0_i32 = arith.constant 0 : i32
    %c0_i32_0 = arith.constant 0 : i32
    return %arg0, %c0_i32 : i32, i32
  }
  func.func @transform_1(%arg0: i32) -> (i32, i32) {
    %c0_i32 = arith.constant 0 : i32
    %c0_i32_0 = arith.constant 0 : i32
    %c0_i32_1 = arith.constant 0 : i32
    return %c0_i32, %c0_i32_0 : i32, i32
  }
  func.func @transform_2(%arg0: i32) -> (i32, i32) {
    %c0_i32 = arith.constant 0 : i32
    %c0_i32_0 = arith.constant 0 : i32
    %c0_i32_1 = arith.constant 0 : i32
    return %c0_i32, %c0_i32_0 : i32, i32
  }
  func.func @transform_3(%arg0: i32) -> (i32, i32) {
    %c0_i32 = arith.constant 0 : i32
    %c0_i32_0 = arith.constant 0 : i32
    return %arg0, %c0_i32 : i32, i32
  }
}

</mosaic_0001>

<llo_original>
// kernel: _linear_forward.1
$region0: #{_linear_forward.1}
  #allocation0 [shape = 'u32[]', space=smem, size = 0x4, offset = 0x4, fixed_abs, tag = 'smem constant byte address 0x4 - core index']
  #allocation1 [shape = 'u32[144,128]{1,0:T(1,128)}', space=vmem, size = 0x12000, scoped, tag = 'internal scratch']
  %s0 = inlined_call_operand.hbm [shape: f32[16,32], index: 0, kind: input, shape index: {}]
  %s1 = inlined_call_operand.hbm [shape: f32[32,128], index: 1, kind: input, shape index: {}]
  %s2 = inlined_call_operand.vmem [shape: f32[1,128], index: 2, kind: input, shape index: {}]
  %s3 = inlined_call_operand.vmem [shape: f32[16,128], index: 3, kind: output, shape index: {}]
  %s4 = sld [smem:[#allocation0]]
  $region30: #{_linear_forward.1} parent=0
    _
  %s6 = ssub.s32 1, %s4
  %s7 = scalar_select 0, %s6, %s4
  $region1: #{_linear_forward.1} parent=0
    #allocation2 [shape = 'u8[8192]{0}', space=vmem, size = 0x2000, scoped, tag = 'input window, operand 0, single buffered']
    #allocation3 [shape = 's32[1]{0}', space=sflag, size = 0x4, scoped, tag = 'scoped memory for _linear_forward.1']
    #allocation4 [shape = 'u8[16384]{0}', space=vmem, size = 0x4000, scoped, tag = 'input window, operand 1, single buffered']
    #allocation5 [shape = 's32[1]{0}', space=sflag, size = 0x4, scoped, tag = 'scoped memory for _linear_forward.1']
    %8 = vsyncpa [#allocation3], 0
    %9 = vsyncpa [#allocation5], 0
    // Predicated region
    $region2: #{_linear_forward.1} parent=1 // pred_check
      _
    $region3: #{_linear_forward.1} parent=1 // pred_check_branch
      %11 = sbr.rel (0) target = $region5
    $region4: #{_linear_forward.1} parent=1 // pred_region
      %s13 = ssub.s32 256, 256
      %14 = vsyncadd [#allocation3], %s13
      %s15 = sshll.u32 [#allocation2], 4
      %s16 = int_to_ptr.vmem [resolvable:$true] %s15
      %21 = dma.hbm_to_vmem [thread:$0]  %s0, 256, %s16, [#allocation3], 128, 128, 8
    $region5: #{_linear_forward.1} parent=1 // pred_fallthru
      _
    // Predicated region
    $region6: #{_linear_forward.1} parent=1 // pred_check
      _
    $region7: #{_linear_forward.1} parent=1 // pred_check_branch
      %23 = sbr.rel (0) target = $region9
    $region8: #{_linear_forward.1} parent=1 // pred_region
      %s25 = ssub.s32 512, 512
      %26 = vsyncadd [#allocation5], %s25
      %s27 = sshll.u32 [#allocation4], 4
      %s28 = int_to_ptr.vmem [resolvable:$true] %s27
      %33 = dma.hbm_to_vmem [thread:$0]  %s1, 512, %s28, [#allocation5], 128, 128, 8
    $region9: #{_linear_forward.1} parent=1 // pred_fallthru
      _
    // Predicated region
    $region10: #{_linear_forward.1} parent=1 // pred_check
      _
    $region11: #{_linear_forward.1} parent=1 // pred_check_branch
      %35 = sbr.rel (0) target = $region13
    $region12: #{_linear_forward.1} parent=1 // pred_region
      _
    $region13: #{_linear_forward.1} parent=1 // pred_fallthru
      _
    // Predicated region
    $region14: #{_linear_forward.1} parent=1 // pred_check
      _
    $region15: #{_linear_forward.1} parent=1 // pred_check_branch
      %37 = sbr.rel (0) target = $region17
    $region16: #{_linear_forward.1} parent=1 // pred_region
      %38 = dma.done [#allocation3], 256
    $region17: #{_linear_forward.1} parent=1 // pred_fallthru
      _
    // Predicated region
    $region18: #{_linear_forward.1} parent=1 // pred_check
      _
    $region19: #{_linear_forward.1} parent=1 // pred_check_branch
      %40 = sbr.rel (0) target = $region21
    $region20: #{_linear_forward.1} parent=1 // pred_region
      %41 = dma.done [#allocation5], 512
    $region21: #{_linear_forward.1} parent=1 // pred_fallthru
      _
    %v42 = vld [vmem:[#allocation2] sm:$0xff]
    %v43 = vld [vmem:[#allocation2 + $0x8] sm:$0xff]
    %v44 = vld [vmem:[#allocation4] sm:$0xff]
    %v45 = vld [vmem:[#allocation4 + $0x8] sm:$0xff]
    %v46 = vld [vmem:[#allocation4 + $0x10] sm:$0xff]
    %v47 = vld [vmem:[#allocation4 + $0x18] sm:$0xff]
    %v48 = vld [vmem:[%s2] sm:$0x1]
    %v50 = vlaneseq
    %v51 = vshrl.u32 %v50, 7
    %v52 = vsub.s32 0, %v51
    %v53 = vrot.slane %v48, %v52
    %vm55 = vcmask 261120
    %v57 = vsel %vm55, %v42, 0
    %v60 = vsel %vm55, %v43, 0
    %62 = vmatprep.subr.mxu0 0.0
    %63 = vmatpush1.msra.mxu0 %v44
    %64 = vmatprep.subr.mxu0 0.0
    %65 = vmatpush1.msra.mxu0 %v45
    %66 = vmatprep.subr.mxu0 0.0
    %67 = vmatpush1.msra.mxu0 %v46
    %68 = vmatprep.subr.mxu0 0.0
    %69 = vmatpush1.msra.mxu0 %v47
    %70 = vmatprep.subr.mxu0 0.0
    %71 = vmatpush1.msra.mxu0 0.0
    %72 = vmatprep.subr.mxu0 0.0
    %73 = vmatpush1.msra.mxu0 0.0
    %74 = vmatprep.subr.mxu0 0.0
    %75 = vmatpush1.msra.mxu0 0.0
    %76 = vmatprep.subr.mxu0 0.0
    %77 = vmatpush1.msra.mxu0 0.0
    %78 = vmatprep.subr.mxu0 0.0
    %79 = vmatpush1.msra.mxu0 0.0
    %80 = vmatprep.subr.mxu0 0.0
    %81 = vmatpush1.msra.mxu0 0.0
    %82 = vmatprep.subr.mxu0 0.0
    %83 = vmatpush1.msra.mxu0 0.0
    %84 = vmatprep.subr.mxu0 0.0
    %85 = vmatpush1.msra.mxu0 0.0
    %86 = vmatprep.subr.mxu0 0.0
    %87 = vmatpush1.msra.mxu0 0.0
    %88 = vmatprep.subr.mxu0 0.0
    %89 = vmatpush1.msra.mxu0 0.0
    %90 = vmatprep.subr.mxu0 0.0
    %91 = vmatpush1.msra.mxu0 0.0
    %92 = vmatprep.subr.mxu0 0.0
    %93 = vmatpush1.msra.mxu0 0.0
    %94 = vmatprep.subr.mxu0 0.0
    %95 = vmatpush1.msra.mxu0 0.0
    %96 = vmatprep.subr.mxu0 0.0
    %97 = vmatpush1.msra.mxu0 0.0
    %98 = vmatprep.subr.mxu0 0.0
    %99 = vmatpush1.msra.mxu0 0.0
    %100 = vmatprep.subr.mxu0 0.0
    %101 = vmatpush1.msra.mxu0 0.0
    %102 = vmatprep.subr.mxu0 0.0
    %103 = vmatpush1.msra.mxu0 0.0
    %104 = vmatprep.subr.mxu0 0.0
    %105 = vmatpush1.msra.mxu0 0.0
    %106 = vmatprep.subr.mxu0 0.0
    %107 = vmatpush1.msra.mxu0 0.0
    %108 = vmatprep.subr.mxu0 0.0
    %109 = vmatpush1.msra.mxu0 0.0
    %110 = vmatprep.subr.mxu0 0.0
    %111 = vmatpush1.msra.mxu0 0.0
    %112 = vmatprep.subr.mxu0 0.0
    %113 = vmatpush1.msra.mxu0 0.0
    %114 = vmatprep.subr.mxu0 0.0
    %115 = vmatpush1.msra.mxu0 0.0
    %116 = vmatprep.subr.mxu0 0.0
    %117 = vmatpush1.msra.mxu0 0.0
    %118 = vmatprep.subr.mxu0 0.0
    %119 = vmatpush1.msra.mxu0 0.0
    %120 = vmatprep.subr.mxu0 0.0
    %121 = vmatpush1.msra.mxu0 0.0
    %122 = vmatprep.subr.mxu0 0.0
    %123 = vmatpush1.msra.mxu0 0.0
    %124 = vmatprep.subr.mxu0 0.0
    %125 = vmatpush1.msra.mxu0 0.0
    %126 = vmatprep.mubr.f32.mxu0 0.0
    %127 = vmatmul.mubr.f32.gmra.mrb[0].mxu0 %v57
    %v128 = vpop.f32.mrb[0].mxu0
    %v129 = vadd.f32 %v53, %v128
    %v130 = vpop.f32.mrb[0].mxu0
    %131 = vmatprep.mubr.f32.mxu0 0.0
    %132 = vmatmul.mubr.f32.gmra.mrb[0].mxu0 %v60
    %v133 = vpop.f32.mrb[0].mxu0
    %v134 = vadd.f32 %v53, %v133
    %v135 = vpop.f32.mrb[0].mxu0
    %136 = vdwg.mxu0
    %137 = vst [vmem:[%s3] sm:$0xff] %v129
    %138 = vst [vmem:[%s3 + $0x8] sm:$0xff] %v134
    // Predicated region
    $region22: #{_linear_forward.1} parent=1 // pred_check
      _
    $region23: #{_linear_forward.1} parent=1 // pred_check_branch
      %140 = sbr.rel (0) target = $region25
    $region24: #{_linear_forward.1} parent=1 // pred_region
      _
    $region25: #{_linear_forward.1} parent=1 // pred_fallthru
      _
    // Predicated region
    $region26: #{_linear_forward.1} parent=1 // pred_check
      _
    $region27: #{_linear_forward.1} parent=1 // pred_check_branch
      %142 = sbr.rel (0) target = $region29
    $region28: #{_linear_forward.1} parent=1 // pred_region
      _
    $region29: #{_linear_forward.1} parent=1 // pred_fallthru
      _
    %143 = vsyncpa [#allocation3], 1
    %144 = vsyncpa [#allocation5], 1

</llo_original>
